<compile_context>
chip_gen: v6e
topology: v6e:2x2x1
jax: 0.10.0
libtpu: 0.0.40
codegen_flags: <defaults>
</compile_context>

<pallas_src>
import jax
import jax.numpy as jnp
from jax.experimental import pallas as pl
from jax.experimental.pallas import tpu as pltpu

IN_FEATURES = 1024
OUT_FEATURES = 16

_SMALL_BATCH_THRESHOLD = 256   # below this, XLA's fused dot beats kernel launch
_MAX_TILE_ROWS = 2048          # 8 MiB/f32 x-buffer; 16 MiB double-buffered


def _linear_kernel(x_ref, w_ref, b_ref, o_ref):
    # One (TB, 1024) @ (1024, 16) MXU matmul per grid step; f32 accumulate,
    # f32 bias add, downcast only at the store.
    acc = jnp.dot(x_ref[...], w_ref[...], preferred_element_type=jnp.float32)
    o_ref[...] = (acc + b_ref[...]).astype(o_ref.dtype)


def _round_up(v, m):
    return ((v + m - 1) // m) * m


def classifier_forward(x, w_t, b, *, compute_dtype=None, force_pallas=False):
    """Linear(1024, 16) forward.

    x:   [B, 1024]
    w_t: [1024, 16]  (pre-transposed nn.Linear weight)
    b:   [16]
    compute_dtype: optionally cast x/w_t (e.g. jnp.bfloat16) to halve HBM bytes;
                   accumulation stays f32 and the output keeps x's dtype.
    """
    B, K = x.shape
    Kw, N = w_t.shape
    assert K == Kw == IN_FEATURES and N == OUT_FEATURES
    out_dtype = x.dtype

    # Small-batch fast path: fixed pallas_call overhead dwarfs 2*B*K*N FLOPs.
    if (not force_pallas) and B < _SMALL_BATCH_THRESHOLD:
        acc = jnp.dot(x, w_t, preferred_element_type=jnp.float32) + b
        return acc.astype(out_dtype)

    if compute_dtype is not None:
        x = x.astype(compute_dtype)
        w_t = w_t.astype(compute_dtype)
    b2d = b.reshape(1, N).astype(jnp.float32)

    # Tile rows: sublane-aligned (8 for 32-bit, 16 for 16-bit), capped at
    # _MAX_TILE_ROWS, and sized so the grid has >= 2 steps when B allows it
    # (keeps both v7x TensorCores busy via the "parallel" axis).
    row_align = 16 if jnp.dtype(x.dtype).itemsize == 2 else 8
    TB = min(_MAX_TILE_ROWS, max(row_align, _round_up(pl.cdiv(B, 2), row_align)))
    grid = (pl.cdiv(B, TB),)   # ragged last block handled by Pallas masking

    itemsize = jnp.dtype(x.dtype).itemsize
    cost = pl.CostEstimate(
        flops=2 * B * K * N,
        transcendentals=0,
        bytes_accessed=(B * K * itemsize            # streamed x
                        + K * N * itemsize          # weight (read once)
                        + N * 4                     # bias
                        + B * N * jnp.dtype(out_dtype).itemsize),  # output
    )

    return pl.pallas_call(
        _linear_kernel,
        out_shape=jax.ShapeDtypeStruct((B, N), out_dtype),
        grid=grid,
        in_specs=[
            pl.BlockSpec((TB, K), lambda i: (i, 0)),   # streamed x tiles
            pl.BlockSpec((K, N), lambda i: (0, 0)),    # weight: VMEM-resident
            pl.BlockSpec((1, N), lambda i: (0, 0)),    # bias:   VMEM-resident
        ],
        out_specs=pl.BlockSpec((TB, N), lambda i: (i, 0)),
        compiler_params=pltpu.CompilerParams(
            # Batch axis is fully parallel -> megacore sharding on v7x.
            dimension_semantics=("parallel",),
            # ~19 MiB peak at TB=2048 f32; raise above v5e's 16 MiB default.
            vmem_limit_bytes=32 * 1024 * 1024,
        ),
        cost_estimate=cost,
    )(x, w_t, b2d)


def init_params(key):
    """Deterministic init matching nn.Linear(1024, 16) shapes.

    PyTorch stores weight as [out_features, in_features] = [16, 1024];
    we keep it pre-transposed as [1024, 16] so the kernel does a plain matmul.
    """
    k_w, k_b = jax.random.split(key)
    bound = 1.0 / jnp.sqrt(float(IN_FEATURES))  # PyTorch default U(-1/sqrt(fan_in), +)
    w = jax.random.uniform(k_w, (OUT_FEATURES, IN_FEATURES), jnp.float32, -bound, bound)
    b = jax.random.uniform(k_b, (OUT_FEATURES,), jnp.float32, -bound, bound)
    return w.T, b  # pre-transposed weight [1024, 16], bias [16]


if __name__ == "__main__":
    key = jax.random.PRNGKey(0)
    k_x, k_p = jax.random.split(key)

    # Small demo shape consistent with the module's forward: x is [B, 1024].
    batch = 2
    x = jax.random.normal(k_x, (batch, IN_FEATURES), jnp.float32)
    w_t, b = init_params(k_p)
    ref = x @ w_t + b

    # 1) Default path at B=2 takes the small-batch bypass (no kernel launch).
    out_fast = jax.block_until_ready(classifier_forward(x, w_t, b))
    assert out_fast.shape == (batch, OUT_FEATURES)
    assert jnp.allclose(out_fast, ref, atol=1e-5, rtol=1e-5)

    # 2) Force the Pallas kernel at the same small shape (single ragged block).
    out_pallas = jax.block_until_ready(classifier_forward(x, w_t, b, force_pallas=True))
    assert out_pallas.shape == (batch, OUT_FEATURES)
    assert jnp.allclose(out_pallas, ref, atol=1e-5, rtol=1e-5)

    # 3) Larger, non-multiple-of-tile batch: ragged last block, no jnp.pad copy.
    big_x = jax.random.normal(k_x, (1000, IN_FEATURES), jnp.float32)
    big_ref = big_x @ w_t + b
    big_out = jax.block_until_ready(classifier_forward(big_x, w_t, b))
    assert big_out.shape == (1000, OUT_FEATURES)
    assert jnp.allclose(big_out, big_ref, atol=1e-4, rtol=1e-4)

    # 4) Optional bf16-input path (f32 accumulation; only input rounding differs).
    bf_out = jax.block_until_ready(
        classifier_forward(big_x, w_t, b, compute_dtype=jnp.bfloat16))
    assert bf_out.dtype == big_x.dtype
    assert jnp.allclose(bf_out, big_ref, atol=1e-1, rtol=1e-1)

    print("KERNEL_OK")
</pallas_src>

<mosaic_0001>
module attributes {stable_mosaic.version = 11 : i64} {
  func.func @_linear_kernel(%arg0: i32, %arg1: memref<8x1024xf32, #tpu.memory_space<vmem>>, %arg2: memref<1024x16xf32, #tpu.memory_space<vmem>>, %arg3: memref<1x16xf32, #tpu.memory_space<vmem>>, %arg4: memref<8x16xf32, #tpu.memory_space<vmem>>) attributes {dimension_semantics = [#tpu.dimension_semantics<parallel>], iteration_bounds = array<i64: 1>, scalar_prefetch = 0 : i64, scratch_operands = 0 : i64, tpu.core_type = #tpu.core_type<tc>, window_params = [{transform_indices = @transform_0, window_bounds = array<i64: 8, 1024>}, {pipeline_mode = #tpu.pipeline_mode<synchronous>, transform_indices = @transform_1, window_bounds = array<i64: 1024, 16>}, {pipeline_mode = #tpu.pipeline_mode<synchronous>, transform_indices = @transform_2, window_bounds = array<i64: 1, 16>}, {transform_indices = @transform_3, window_bounds = array<i64: 8, 16>}]} {
    %c0 = arith.constant 0 : index
    %c0_0 = arith.constant 0 : index
    %0 = vector.load %arg1[%c0, %c0_0] : memref<8x1024xf32, #tpu.memory_space<vmem>>, vector<8x1024xf32>
    %c0_1 = arith.constant 0 : index
    %c0_2 = arith.constant 0 : index
    %1 = vector.load %arg2[%c0_1, %c0_2] : memref<1024x16xf32, #tpu.memory_space<vmem>>, vector<1024x16xf32>
    %cst = arith.constant dense<0.000000e+00> : vector<8x16xf32>
    %2 = tpu.matmul %0, %1, %cst {dimension_numbers = #tpu.dot_dimension_numbers<[1], [0], [0], [1], [0, 0, 1, 1], [], []>} : vector<8x1024xf32>, vector<1024x16xf32>, vector<8x16xf32> -> vector<8x16xf32>
    %c0_3 = arith.constant 0 : index
    %c0_4 = arith.constant 0 : index
    %3 = vector.load %arg3[%c0_3, %c0_4] : memref<1x16xf32, #tpu.memory_space<vmem>>, vector<1x16xf32>
    %4 = vector.broadcast %3 : vector<1x16xf32> to vector<8x16xf32>
    %5 = arith.addf %2, %4 : vector<8x16xf32>
    %c0_5 = arith.constant 0 : index
    %c0_6 = arith.constant 0 : index
    %6 = vector.load %arg4[%c0_5, %c0_6] : memref<8x16xf32, #tpu.memory_space<vmem>>, vector<8x16xf32>
    tpu.vector_store %arg4[%c0_5, %c0_6], %5 {strides = array<i32>} : memref<8x16xf32, #tpu.memory_space<vmem>>, vector<8x16xf32>,
    return
  }
  func.func @transform_0(%arg0: i32) -> (i32, i32) {
    %c0_i32 = arith.constant 0 : i32
    %c0_i32_0 = arith.constant 0 : i32
    return %arg0, %c0_i32 : i32, i32
  }
  func.func @transform_1(%arg0: i32) -> (i32, i32) {
    %c0_i32 = arith.constant 0 : i32
    %c0_i32_0 = arith.constant 0 : i32
    %c0_i32_1 = arith.constant 0 : i32
    return %c0_i32, %c0_i32_0 : i32, i32
  }
  func.func @transform_2(%arg0: i32) -> (i32, i32) {
    %c0_i32 = arith.constant 0 : i32
    %c0_i32_0 = arith.constant 0 : i32
    %c0_i32_1 = arith.constant 0 : i32
    return %c0_i32, %c0_i32_0 : i32, i32
  }
  func.func @transform_3(%arg0: i32) -> (i32, i32) {
    %c0_i32 = arith.constant 0 : i32
    %c0_i32_0 = arith.constant 0 : i32
    return %arg0, %c0_i32 : i32, i32
  }
}

</mosaic_0001>

<llo_original>
// kernel: tpu_custom_call.1
$region0: #{tpu_custom_call.1}
  #allocation0 [shape = 'u32[]', space=smem, size = 0x4, offset = 0x4, fixed_abs, tag = 'smem constant byte address 0x4 - core index']
  #allocation1 [shape = 'u32[144,128]{1,0:T(1,128)}', space=vmem, size = 0x12000, scoped, tag = 'internal scratch']
  %s0 = inlined_call_operand.vmem [shape: f32[2,1024], index: 0, kind: input, shape index: {}]
  %s1 = inlined_call_operand.vmem [shape: f32[1024,16], index: 1, kind: input, shape index: {}]
  %s2 = inlined_call_operand.vmem [shape: f32[1,16], index: 2, kind: input, shape index: {}]
  %s3 = inlined_call_operand.hbm [shape: f32[2,16], index: 3, kind: output, shape index: {}]
  %s4 = sld [smem:[#allocation0]]
  $region22: #{tpu_custom_call.1} parent=0
    _
  %s6 = ssub.s32 1, %s4
  %s7 = scalar_select 0, %s6, %s4
  $region1: #{tpu_custom_call.1} parent=0
    #allocation2 [shape = 'u8[4096]{0}', space=vmem, size = 0x1000, scoped, tag = 'output window, operand 0, single buffered']
    #allocation3 [shape = 's32[1]{0}', space=sflag, size = 0x4, scoped, tag = 'scoped memory for tpu_custom_call.1']
    %8 = vsyncpa [#allocation3], 0
    // Predicated region
    $region2: #{tpu_custom_call.1} parent=1 // pred_check
      _
    $region3: #{tpu_custom_call.1} parent=1 // pred_check_branch
      %10 = sbr.rel (0) target = $region5
    $region4: #{tpu_custom_call.1} parent=1 // pred_region
      _
    $region5: #{tpu_custom_call.1} parent=1 // pred_fallthru
      _
    // Predicated region
    $region6: #{tpu_custom_call.1} parent=1 // pred_check
      _
    $region7: #{tpu_custom_call.1} parent=1 // pred_check_branch
      %12 = sbr.rel (0) target = $region9
    $region8: #{tpu_custom_call.1} parent=1 // pred_region
      _
    $region9: #{tpu_custom_call.1} parent=1 // pred_fallthru
      _
    // Predicated region
    $region10: #{tpu_custom_call.1} parent=1 // pred_check
      _
    $region11: #{tpu_custom_call.1} parent=1 // pred_check_branch
      %14 = sbr.rel (0) target = $region13
    $region12: #{tpu_custom_call.1} parent=1 // pred_region
      _
    $region13: #{tpu_custom_call.1} parent=1 // pred_fallthru
      _
    %v15 = vld [vmem:[%s0] sm:$0xff]
    %v16 = vld [vmem:[%s0 + $0x8] sm:$0xff]
    %v17 = vld [vmem:[%s0 + $0x10] sm:$0xff]
    %v18 = vld [vmem:[%s0 + $0x18] sm:$0xff]
    %v19 = vld [vmem:[%s0 + $0x20] sm:$0xff]
    %v20 = vld [vmem:[%s0 + $0x28] sm:$0xff]
    %v21 = vld [vmem:[%s0 + $0x30] sm:$0xff]
    %v22 = vld [vmem:[%s0 + $0x38] sm:$0xff]
    %v23 = vld [vmem:[%s1] sm:$0xff]
    %v24 = vld [vmem:[%s1 + $0x8] sm:$0xff]
    %v25 = vld [vmem:[%s1 + $0x10] sm:$0xff]
    %v26 = vld [vmem:[%s1 + $0x18] sm:$0xff]
    %v27 = vld [vmem:[%s1 + $0x20] sm:$0xff]
    %v28 = vld [vmem:[%s1 + $0x28] sm:$0xff]
    %v29 = vld [vmem:[%s1 + $0x30] sm:$0xff]
    %v30 = vld [vmem:[%s1 + $0x38] sm:$0xff]
    %v31 = vld [vmem:[%s1 + $0x40] sm:$0xff]
    %v32 = vld [vmem:[%s1 + $0x48] sm:$0xff]
    %v33 = vld [vmem:[%s1 + $0x50] sm:$0xff]
    %v34 = vld [vmem:[%s1 + $0x58] sm:$0xff]
    %v35 = vld [vmem:[%s1 + $0x60] sm:$0xff]
    %v36 = vld [vmem:[%s1 + $0x68] sm:$0xff]
    %v37 = vld [vmem:[%s1 + $0x70] sm:$0xff]
    %v38 = vld [vmem:[%s1 + $0x78] sm:$0xff]
    %v39 = vld [vmem:[%s1 + $0x80] sm:$0xff]
    %v40 = vld [vmem:[%s1 + $0x88] sm:$0xff]
    %v41 = vld [vmem:[%s1 + $0x90] sm:$0xff]
    %v42 = vld [vmem:[%s1 + $0x98] sm:$0xff]
    %v43 = vld [vmem:[%s1 + $0xa0] sm:$0xff]
    %v44 = vld [vmem:[%s1 + $0xa8] sm:$0xff]
    %v45 = vld [vmem:[%s1 + $0xb0] sm:$0xff]
    %v46 = vld [vmem:[%s1 + $0xb8] sm:$0xff]
    %v47 = vld [vmem:[%s1 + $0xc0] sm:$0xff]
    %v48 = vld [vmem:[%s1 + $0xc8] sm:$0xff]
    %v49 = vld [vmem:[%s1 + $0xd0] sm:$0xff]
    %v50 = vld [vmem:[%s1 + $0xd8] sm:$0xff]
    %v51 = vld [vmem:[%s1 + $0xe0] sm:$0xff]
    %v52 = vld [vmem:[%s1 + $0xe8] sm:$0xff]
    %v53 = vld [vmem:[%s1 + $0xf0] sm:$0xff]
    %v54 = vld [vmem:[%s1 + $0xf8] sm:$0xff]
    %v55 = vld [vmem:[%s1 + $0x100] sm:$0xff]
    %v56 = vld [vmem:[%s1 + $0x108] sm:$0xff]
    %v57 = vld [vmem:[%s1 + $0x110] sm:$0xff]
    %v58 = vld [vmem:[%s1 + $0x118] sm:$0xff]
    %v59 = vld [vmem:[%s1 + $0x120] sm:$0xff]
    %v60 = vld [vmem:[%s1 + $0x128] sm:$0xff]
    %v61 = vld [vmem:[%s1 + $0x130] sm:$0xff]
    %v62 = vld [vmem:[%s1 + $0x138] sm:$0xff]
    %v63 = vld [vmem:[%s1 + $0x140] sm:$0xff]
    %v64 = vld [vmem:[%s1 + $0x148] sm:$0xff]
    %v65 = vld [vmem:[%s1 + $0x150] sm:$0xff]
    %v66 = vld [vmem:[%s1 + $0x158] sm:$0xff]
    %v67 = vld [vmem:[%s1 + $0x160] sm:$0xff]
    %v68 = vld [vmem:[%s1 + $0x168] sm:$0xff]
    %v69 = vld [vmem:[%s1 + $0x170] sm:$0xff]
    %v70 = vld [vmem:[%s1 + $0x178] sm:$0xff]
    %v71 = vld [vmem:[%s1 + $0x180] sm:$0xff]
    %v72 = vld [vmem:[%s1 + $0x188] sm:$0xff]
    %v73 = vld [vmem:[%s1 + $0x190] sm:$0xff]
    %v74 = vld [vmem:[%s1 + $0x198] sm:$0xff]
    %v75 = vld [vmem:[%s1 + $0x1a0] sm:$0xff]
    %v76 = vld [vmem:[%s1 + $0x1a8] sm:$0xff]
    %v77 = vld [vmem:[%s1 + $0x1b0] sm:$0xff]
    %v78 = vld [vmem:[%s1 + $0x1b8] sm:$0xff]
    %v79 = vld [vmem:[%s1 + $0x1c0] sm:$0xff]
    %v80 = vld [vmem:[%s1 + $0x1c8] sm:$0xff]
    %v81 = vld [vmem:[%s1 + $0x1d0] sm:$0xff]
    %v82 = vld [vmem:[%s1 + $0x1d8] sm:$0xff]
    %v83 = vld [vmem:[%s1 + $0x1e0] sm:$0xff]
    %v84 = vld [vmem:[%s1 + $0x1e8] sm:$0xff]
    %v85 = vld [vmem:[%s1 + $0x1f0] sm:$0xff]
    %v86 = vld [vmem:[%s1 + $0x1f8] sm:$0xff]
    %v87 = vld [vmem:[%s1 + $0x200] sm:$0xff]
    %v88 = vld [vmem:[%s1 + $0x208] sm:$0xff]
    %v89 = vld [vmem:[%s1 + $0x210] sm:$0xff]
    %v90 = vld [vmem:[%s1 + $0x218] sm:$0xff]
    %v91 = vld [vmem:[%s1 + $0x220] sm:$0xff]
    %v92 = vld [vmem:[%s1 + $0x228] sm:$0xff]
    %v93 = vld [vmem:[%s1 + $0x230] sm:$0xff]
    %v94 = vld [vmem:[%s1 + $0x238] sm:$0xff]
    %v95 = vld [vmem:[%s1 + $0x240] sm:$0xff]
    %v96 = vld [vmem:[%s1 + $0x248] sm:$0xff]
    %v97 = vld [vmem:[%s1 + $0x250] sm:$0xff]
    %v98 = vld [vmem:[%s1 + $0x258] sm:$0xff]
    %v99 = vld [vmem:[%s1 + $0x260] sm:$0xff]
    %v100 = vld [vmem:[%s1 + $0x268] sm:$0xff]
    %v101 = vld [vmem:[%s1 + $0x270] sm:$0xff]
    %v102 = vld [vmem:[%s1 + $0x278] sm:$0xff]
    %v103 = vld [vmem:[%s1 + $0x280] sm:$0xff]
    %v104 = vld [vmem:[%s1 + $0x288] sm:$0xff]
    %v105 = vld [vmem:[%s1 + $0x290] sm:$0xff]
    %v106 = vld [vmem:[%s1 + $0x298] sm:$0xff]
    %v107 = vld [vmem:[%s1 + $0x2a0] sm:$0xff]
    %v108 = vld [vmem:[%s1 + $0x2a8] sm:$0xff]
    %v109 = vld [vmem:[%s1 + $0x2b0] sm:$0xff]
    %v110 = vld [vmem:[%s1 + $0x2b8] sm:$0xff]
    %v111 = vld [vmem:[%s1 + $0x2c0] sm:$0xff]
    %v112 = vld [vmem:[%s1 + $0x2c8] sm:$0xff]
    %v113 = vld [vmem:[%s1 + $0x2d0] sm:$0xff]
    %v114 = vld [vmem:[%s1 + $0x2d8] sm:$0xff]
    %v115 = vld [vmem:[%s1 + $0x2e0] sm:$0xff]
    %v116 = vld [vmem:[%s1 + $0x2e8] sm:$0xff]
    %v117 = vld [vmem:[%s1 + $0x2f0] sm:$0xff]
    %v118 = vld [vmem:[%s1 + $0x2f8] sm:$0xff]
    %v119 = vld [vmem:[%s1 + $0x300] sm:$0xff]
    %v120 = vld [vmem:[%s1 + $0x308] sm:$0xff]
    %v121 = vld [vmem:[%s1 + $0x310] sm:$0xff]
    %v122 = vld [vmem:[%s1 + $0x318] sm:$0xff]
    %v123 = vld [vmem:[%s1 + $0x320] sm:$0xff]
    %v124 = vld [vmem:[%s1 + $0x328] sm:$0xff]
    %v125 = vld [vmem:[%s1 + $0x330] sm:$0xff]
    %v126 = vld [vmem:[%s1 + $0x338] sm:$0xff]
    %v127 = vld [vmem:[%s1 + $0x340] sm:$0xff]
    %v128 = vld [vmem:[%s1 + $0x348] sm:$0xff]
    %v129 = vld [vmem:[%s1 + $0x350] sm:$0xff]
    %v130 = vld [vmem:[%s1 + $0x358] sm:$0xff]
    %v131 = vld [vmem:[%s1 + $0x360] sm:$0xff]
    %v132 = vld [vmem:[%s1 + $0x368] sm:$0xff]
    %v133 = vld [vmem:[%s1 + $0x370] sm:$0xff]
    %v134 = vld [vmem:[%s1 + $0x378] sm:$0xff]
    %v135 = vld [vmem:[%s1 + $0x380] sm:$0xff]
    %v136 = vld [vmem:[%s1 + $0x388] sm:$0xff]
    %v137 = vld [vmem:[%s1 + $0x390] sm:$0xff]
    %v138 = vld [vmem:[%s1 + $0x398] sm:$0xff]
    %v139 = vld [vmem:[%s1 + $0x3a0] sm:$0xff]
    %v140 = vld [vmem:[%s1 + $0x3a8] sm:$0xff]
    %v141 = vld [vmem:[%s1 + $0x3b0] sm:$0xff]
    %v142 = vld [vmem:[%s1 + $0x3b8] sm:$0xff]
    %v143 = vld [vmem:[%s1 + $0x3c0] sm:$0xff]
    %v144 = vld [vmem:[%s1 + $0x3c8] sm:$0xff]
    %v145 = vld [vmem:[%s1 + $0x3d0] sm:$0xff]
    %v146 = vld [vmem:[%s1 + $0x3d8] sm:$0xff]
    %v147 = vld [vmem:[%s1 + $0x3e0] sm:$0xff]
    %v148 = vld [vmem:[%s1 + $0x3e8] sm:$0xff]
    %v149 = vld [vmem:[%s1 + $0x3f0] sm:$0xff]
    %v150 = vld [vmem:[%s1 + $0x3f8] sm:$0xff]
    %v151 = vld [vmem:[%s2] sm:$0x1]
    %v153 = vlaneseq
    %v154 = vshrl.u32 %v153, 7
    %v155 = vsub.s32 0, %v154
    %v156 = vrot.slane %v151, %v155
    %v166 = vcombine.low %v15, %v17
    %v167 = vcombine.high %v15, %v17
    %v168 = vcombine.low %v19, %v21
    %v169 = vcombine.high %v19, %v21
    %v171 = vunpack.c.l.s4 1983009808
    %v172 = vunpack.c.0.s8 %v171
    %v173 = vlaneseq
    %v174 = vshrl.u32 %v173, 7
    %v175 = vsub.s32 %v172, %v174
    %v176 = vrot.slane %v166, %v175
    %v178 = vunpack.c.l.s4 1983009808
    %v179 = vunpack.c.0.s8 %v178
    %v180 = vlaneseq
    %v181 = vshrl.u32 %v180, 7
    %v182 = vsub.s32 %v179, %v181
    %v183 = vrot.slane %v167, %v182
    %v185 = vunpack.c.l.s4 1983009808
    %v186 = vunpack.c.0.s8 %v185
    %v187 = vlaneseq
    %v188 = vshrl.u32 %v187, 7
    %v189 = vsub.s32 %v186, %v188
    %v190 = vrot.slane %v168, %v189
    %v192 = vunpack.c.l.s4 1983009808
    %v193 = vunpack.c.0.s8 %v192
    %v194 = vlaneseq
    %v195 = vshrl.u32 %v194, 7
    %v196 = vsub.s32 %v193, %v195
    %v197 = vrot.slane %v169, %v196
    %v198 = vcombine.low %v176, %v190
    %v199 = vcombine.high %v176, %v190
    %v200 = vcombine.low %v183, %v197
    %v201 = vcombine.high %v183, %v197
    %v202 = vcombine.low %v16, %v18
    %v203 = vcombine.high %v16, %v18
    %v204 = vcombine.low %v20, %v22
    %v205 = vcombine.high %v20, %v22
    %v207 = vunpack.c.l.s4 1983009808
    %v208 = vunpack.c.0.s8 %v207
    %v209 = vlaneseq
    %v210 = vshrl.u32 %v209, 7
    %v211 = vsub.s32 %v208, %v210
    %v212 = vrot.slane %v202, %v211
    %v214 = vunpack.c.l.s4 1983009808
    %v215 = vunpack.c.0.s8 %v214
    %v216 = vlaneseq
    %v217 = vshrl.u32 %v216, 7
    %v218 = vsub.s32 %v215, %v217
    %v219 = vrot.slane %v203, %v218
    %v221 = vunpack.c.l.s4 1983009808
    %v222 = vunpack.c.0.s8 %v221
    %v223 = vlaneseq
    %v224 = vshrl.u32 %v223, 7
    %v225 = vsub.s32 %v222, %v224
    %v226 = vrot.slane %v204, %v225
    %v228 = vunpack.c.l.s4 1983009808
    %v229 = vunpack.c.0.s8 %v228
    %v230 = vlaneseq
    %v231 = vshrl.u32 %v230, 7
    %v232 = vsub.s32 %v229, %v231
    %v233 = vrot.slane %v205, %v232
    %v234 = vcombine.low %v212, %v226
    %v235 = vcombine.high %v212, %v226
    %v236 = vcombine.low %v219, %v233
    %v237 = vcombine.high %v219, %v233
    %246 = vmatprep.subr.mxu0 0.0
    %247 = vmatpush1.msra.mxu0 %v38
    %248 = vmatprep.subr.mxu0 0.0
    %249 = vmatpush1.msra.mxu0 %v37
    %250 = vmatprep.subr.mxu0 0.0
    %251 = vmatpush1.msra.mxu0 %v36
    %252 = vmatprep.subr.mxu0 0.0
    %253 = vmatpush1.msra.mxu0 %v35
    %254 = vmatprep.subr.mxu0 0.0
    %255 = vmatpush1.msra.mxu0 %v34
    %256 = vmatprep.subr.mxu0 0.0
    %257 = vmatpush1.msra.mxu0 %v33
    %258 = vmatprep.subr.mxu0 0.0
    %259 = vmatpush1.msra.mxu0 %v32
    %260 = vmatprep.subr.mxu0 0.0
    %261 = vmatpush1.msra.mxu0 %v31
    %262 = vmatprep.subr.mxu0 0.0
    %263 = vmatpush1.msra.mxu0 %v30
    %264 = vmatprep.subr.mxu0 0.0
    %265 = vmatpush1.msra.mxu0 %v29
    %266 = vmatprep.subr.mxu0 0.0
    %267 = vmatpush1.msra.mxu0 %v28
    %268 = vmatprep.subr.mxu0 0.0
    %269 = vmatpush1.msra.mxu0 %v27
    %270 = vmatprep.subr.mxu0 0.0
    %271 = vmatpush1.msra.mxu0 %v26
    %272 = vmatprep.subr.mxu0 0.0
    %273 = vmatpush1.msra.mxu0 %v25
    %274 = vmatprep.subr.mxu0 0.0
    %275 = vmatpush1.msra.mxu0 %v24
    %276 = vmatprep.subr.mxu0 0.0
    %277 = vmatpush1.msra.mxu0 %v23
    %278 = vmatprep.subr.mxu0 0.0
    %279 = vmatpush2.msra.mxu0 %v54
    %280 = vmatprep.subr.mxu0 0.0
    %281 = vmatpush2.msra.mxu0 %v53
    %282 = vmatprep.subr.mxu0 0.0
    %283 = vmatpush2.msra.mxu0 %v52
    %284 = vmatprep.subr.mxu0 0.0
    %285 = vmatpush2.msra.mxu0 %v51
    %286 = vmatprep.subr.mxu0 0.0
    %287 = vmatpush2.msra.mxu0 %v50
    %288 = vmatprep.subr.mxu0 0.0
    %289 = vmatpush2.msra.mxu0 %v49
    %290 = vmatprep.subr.mxu0 0.0
    %291 = vmatpush2.msra.mxu0 %v48
    %292 = vmatprep.subr.mxu0 0.0
    %293 = vmatpush2.msra.mxu0 %v47
    %294 = vmatprep.subr.mxu0 0.0
    %295 = vmatpush2.msra.mxu0 %v46
    %296 = vmatprep.subr.mxu0 0.0
    %297 = vmatpush2.msra.mxu0 %v45
    %298 = vmatprep.subr.mxu0 0.0
    %299 = vmatpush2.msra.mxu0 %v44
    %300 = vmatprep.subr.mxu0 0.0
    %301 = vmatpush2.msra.mxu0 %v43
    %302 = vmatprep.subr.mxu0 0.0
    %303 = vmatpush2.msra.mxu0 %v42
    %304 = vmatprep.subr.mxu0 0.0
    %305 = vmatpush2.msra.mxu0 %v41
    %306 = vmatprep.subr.mxu0 0.0
    %307 = vmatpush2.msra.mxu0 %v40
    %308 = vmatprep.subr.mxu0 0.0
    %309 = vmatpush2.msra.mxu0 %v39
    %310 = vmatprep.mubr.f32.mxu0 %v199
    %311 = vmatmul.mubr.f32.gmra.mxu0 %v198
    %v312 = vpop.f32.mrf.mxu0
    %v313 = vadd.f32 %v156, %v312
    %v314 = vpop.f32.mrf.mxu0
    %315 = vdwg.mxu0
    %316 = vmatprep.subr.mxu0 0.0
    %317 = vmatpush1.msra.mxu0 %v70
    %318 = vmatprep.subr.mxu0 0.0
    %319 = vmatpush1.msra.mxu0 %v69
    %320 = vmatprep.subr.mxu0 0.0
    %321 = vmatpush1.msra.mxu0 %v68
    %322 = vmatprep.subr.mxu0 0.0
    %323 = vmatpush1.msra.mxu0 %v67
    %324 = vmatprep.subr.mxu0 0.0
    %325 = vmatpush1.msra.mxu0 %v66
    %326 = vmatprep.subr.mxu0 0.0
    %327 = vmatpush1.msra.mxu0 %v65
    %328 = vmatprep.subr.mxu0 0.0
    %329 = vmatpush1.msra.mxu0 %v64
    %330 = vmatprep.subr.mxu0 0.0
    %331 = vmatpush1.msra.mxu0 %v63
    %332 = vmatprep.subr.mxu0 0.0
    %333 = vmatpush1.msra.mxu0 %v62
    %334 = vmatprep.subr.mxu0 0.0
    %335 = vmatpush1.msra.mxu0 %v61
    %336 = vmatprep.subr.mxu0 0.0
    %337 = vmatpush1.msra.mxu0 %v60
    %338 = vmatprep.subr.mxu0 0.0
    %339 = vmatpush1.msra.mxu0 %v59
    %340 = vmatprep.subr.mxu0 0.0
    %341 = vmatpush1.msra.mxu0 %v58
    %342 = vmatprep.subr.mxu0 0.0
    %343 = vmatpush1.msra.mxu0 %v57
    %344 = vmatprep.subr.mxu0 0.0
    %345 = vmatpush1.msra.mxu0 %v56
    %346 = vmatprep.subr.mxu0 0.0
    %347 = vmatpush1.msra.mxu0 %v55
    %348 = vmatprep.subr.mxu0 0.0
    %349 = vmatpush2.msra.mxu0 %v86
    %350 = vmatprep.subr.mxu0 0.0
    %351 = vmatpush2.msra.mxu0 %v85
    %352 = vmatprep.subr.mxu0 0.0
    %353 = vmatpush2.msra.mxu0 %v84
    %354 = vmatprep.subr.mxu0 0.0
    %355 = vmatpush2.msra.mxu0 %v83
    %356 = vmatprep.subr.mxu0 0.0
    %357 = vmatpush2.msra.mxu0 %v82
    %358 = vmatprep.subr.mxu0 0.0
    %359 = vmatpush2.msra.mxu0 %v81
    %360 = vmatprep.subr.mxu0 0.0
    %361 = vmatpush2.msra.mxu0 %v80
    %362 = vmatprep.subr.mxu0 0.0
    %363 = vmatpush2.msra.mxu0 %v79
    %364 = vmatprep.subr.mxu0 0.0
    %365 = vmatpush2.msra.mxu0 %v78
    %366 = vmatprep.subr.mxu0 0.0
    %367 = vmatpush2.msra.mxu0 %v77
    %368 = vmatprep.subr.mxu0 0.0
    %369 = vmatpush2.msra.mxu0 %v76
    %370 = vmatprep.subr.mxu0 0.0
    %371 = vmatpush2.msra.mxu0 %v75
    %372 = vmatprep.subr.mxu0 0.0
    %373 = vmatpush2.msra.mxu0 %v74
    %374 = vmatprep.subr.mxu0 0.0
    %375 = vmatpush2.msra.mxu0 %v73
    %376 = vmatprep.subr.mxu0 0.0
    %377 = vmatpush2.msra.mxu0 %v72
    %378 = vmatprep.subr.mxu0 0.0
    %379 = vmatpush2.msra.mxu0 %v71
    %380 = vmatprep.mubr.f32.mxu0 %v201
    %381 = vmatmul.mubr.f32.gmra.mxu0 %v200
    %v382 = vpop.f32.mrf.mxu0
    %v383 = vadd.f32 %v313, %v382
    %v384 = vpop.f32.mrf.mxu0
    %385 = vdwg.mxu0
    %386 = vmatprep.subr.mxu0 0.0
    %387 = vmatpush1.msra.mxu0 %v102
    %388 = vmatprep.subr.mxu0 0.0
    %389 = vmatpush1.msra.mxu0 %v101
    %390 = vmatprep.subr.mxu0 0.0
    %391 = vmatpush1.msra.mxu0 %v100
    %392 = vmatprep.subr.mxu0 0.0
    %393 = vmatpush1.msra.mxu0 %v99
    %394 = vmatprep.subr.mxu0 0.0
    %395 = vmatpush1.msra.mxu0 %v98
    %396 = vmatprep.subr.mxu0 0.0
    %397 = vmatpush1.msra.mxu0 %v97
    %398 = vmatprep.subr.mxu0 0.0
    %399 = vmatpush1.msra.mxu0 %v96
    %400 = vmatprep.subr.mxu0 0.0
    %401 = vmatpush1.msra.mxu0 %v95
    %402 = vmatprep.subr.mxu0 0.0
    %403 = vmatpush1.msra.mxu0 %v94
    %404 = vmatprep.subr.mxu0 0.0
    %405 = vmatpush1.msra.mxu0 %v93
    %406 = vmatprep.subr.mxu0 0.0
    %407 = vmatpush1.msra.mxu0 %v92
    %408 = vmatprep.subr.mxu0 0.0
    %409 = vmatpush1.msra.mxu0 %v91
    %410 = vmatprep.subr.mxu0 0.0
    %411 = vmatpush1.msra.mxu0 %v90
    %412 = vmatprep.subr.mxu0 0.0
    %413 = vmatpush1.msra.mxu0 %v89
    %414 = vmatprep.subr.mxu0 0.0
    %415 = vmatpush1.msra.mxu0 %v88
    %416 = vmatprep.subr.mxu0 0.0
    %417 = vmatpush1.msra.mxu0 %v87
    %418 = vmatprep.subr.mxu0 0.0
    %419 = vmatpush2.msra.mxu0 %v118
    %420 = vmatprep.subr.mxu0 0.0
    %421 = vmatpush2.msra.mxu0 %v117
    %422 = vmatprep.subr.mxu0 0.0
    %423 = vmatpush2.msra.mxu0 %v116
    %424 = vmatprep.subr.mxu0 0.0
    %425 = vmatpush2.msra.mxu0 %v115
    %426 = vmatprep.subr.mxu0 0.0
    %427 = vmatpush2.msra.mxu0 %v114
    %428 = vmatprep.subr.mxu0 0.0
    %429 = vmatpush2.msra.mxu0 %v113
    %430 = vmatprep.subr.mxu0 0.0
    %431 = vmatpush2.msra.mxu0 %v112
    %432 = vmatprep.subr.mxu0 0.0
    %433 = vmatpush2.msra.mxu0 %v111
    %434 = vmatprep.subr.mxu0 0.0
    %435 = vmatpush2.msra.mxu0 %v110
    %436 = vmatprep.subr.mxu0 0.0
    %437 = vmatpush2.msra.mxu0 %v109
    %438 = vmatprep.subr.mxu0 0.0
    %439 = vmatpush2.msra.mxu0 %v108
    %440 = vmatprep.subr.mxu0 0.0
    %441 = vmatpush2.msra.mxu0 %v107
    %442 = vmatprep.subr.mxu0 0.0
    %443 = vmatpush2.msra.mxu0 %v106
    %444 = vmatprep.subr.mxu0 0.0
    %445 = vmatpush2.msra.mxu0 %v105
    %446 = vmatprep.subr.mxu0 0.0
    %447 = vmatpush2.msra.mxu0 %v104
    %448 = vmatprep.subr.mxu0 0.0
    %449 = vmatpush2.msra.mxu0 %v103
    %450 = vmatprep.mubr.f32.mxu0 %v235
    %451 = vmatmul.mubr.f32.gmra.mxu0 %v234
    %v452 = vpop.f32.mrf.mxu0
    %v453 = vadd.f32 %v383, %v452
    %v454 = vpop.f32.mrf.mxu0
    %455 = vdwg.mxu0
    %456 = vmatprep.subr.mxu0 0.0
    %457 = vmatpush1.msra.mxu0 %v134
    %458 = vmatprep.subr.mxu0 0.0
    %459 = vmatpush1.msra.mxu0 %v133
    %460 = vmatprep.subr.mxu0 0.0
    %461 = vmatpush1.msra.mxu0 %v132
    %462 = vmatprep.subr.mxu0 0.0
    %463 = vmatpush1.msra.mxu0 %v131
    %464 = vmatprep.subr.mxu0 0.0
    %465 = vmatpush1.msra.mxu0 %v130
    %466 = vmatprep.subr.mxu0 0.0
    %467 = vmatpush1.msra.mxu0 %v129
    %468 = vmatprep.subr.mxu0 0.0
    %469 = vmatpush1.msra.mxu0 %v128
    %470 = vmatprep.subr.mxu0 0.0
    %471 = vmatpush1.msra.mxu0 %v127
    %472 = vmatprep.subr.mxu0 0.0
    %473 = vmatpush1.msra.mxu0 %v126
    %474 = vmatprep.subr.mxu0 0.0
    %475 = vmatpush1.msra.mxu0 %v125
    %476 = vmatprep.subr.mxu0 0.0
    %477 = vmatpush1.msra.mxu0 %v124
    %478 = vmatprep.subr.mxu0 0.0
    %479 = vmatpush1.msra.mxu0 %v123
    %480 = vmatprep.subr.mxu0 0.0
    %481 = vmatpush1.msra.mxu0 %v122
    %482 = vmatprep.subr.mxu0 0.0
    %483 = vmatpush1.msra.mxu0 %v121
    %484 = vmatprep.subr.mxu0 0.0
    %485 = vmatpush1.msra.mxu0 %v120
    %486 = vmatprep.subr.mxu0 0.0
    %487 = vmatpush1.msra.mxu0 %v119
    %488 = vmatprep.subr.mxu0 0.0
    %489 = vmatpush2.msra.mxu0 %v150
    %490 = vmatprep.subr.mxu0 0.0
    %491 = vmatpush2.msra.mxu0 %v149
    %492 = vmatprep.subr.mxu0 0.0
    %493 = vmatpush2.msra.mxu0 %v148
    %494 = vmatprep.subr.mxu0 0.0
    %495 = vmatpush2.msra.mxu0 %v147
    %496 = vmatprep.subr.mxu0 0.0
    %497 = vmatpush2.msra.mxu0 %v146
    %498 = vmatprep.subr.mxu0 0.0
    %499 = vmatpush2.msra.mxu0 %v145
    %500 = vmatprep.subr.mxu0 0.0
    %501 = vmatpush2.msra.mxu0 %v144
    %502 = vmatprep.subr.mxu0 0.0
    %503 = vmatpush2.msra.mxu0 %v143
    %504 = vmatprep.subr.mxu0 0.0
    %505 = vmatpush2.msra.mxu0 %v142
    %506 = vmatprep.subr.mxu0 0.0
    %507 = vmatpush2.msra.mxu0 %v141
    %508 = vmatprep.subr.mxu0 0.0
    %509 = vmatpush2.msra.mxu0 %v140
    %510 = vmatprep.subr.mxu0 0.0
    %511 = vmatpush2.msra.mxu0 %v139
    %512 = vmatprep.subr.mxu0 0.0
    %513 = vmatpush2.msra.mxu0 %v138
    %514 = vmatprep.subr.mxu0 0.0
    %515 = vmatpush2.msra.mxu0 %v137
    %516 = vmatprep.subr.mxu0 0.0
    %517 = vmatpush2.msra.mxu0 %v136
    %518 = vmatprep.subr.mxu0 0.0
    %519 = vmatpush2.msra.mxu0 %v135
    %520 = vmatprep.mubr.f32.mxu0 %v237
    %521 = vmatmul.mubr.f32.gmra.mxu0 %v236
    %v522 = vpop.f32.mrf.mxu0
    %v523 = vadd.f32 %v453, %v522
    %v524 = vpop.f32.mrf.mxu0
    %525 = vdwg.mxu0
    %vm526 = vcmask 130048
    %527 = vst.msk [vmem:[#allocation2] sm:$0xff] %vm526, %v523
    // Predicated region
    $region14: #{tpu_custom_call.1} parent=1 // pred_check
      _
    $region15: #{tpu_custom_call.1} parent=1 // pred_check_branch
      %529 = sbr.rel (0) target = $region17
    $region16: #{tpu_custom_call.1} parent=1 // pred_region
      %s531 = ssub.s32 128, 32
      %532 = vsyncadd [#allocation3], %s531
      %s533 = sshll.u32 [#allocation2], 4
      %s534 = int_to_ptr.vmem [resolvable:$true] %s533
      %539 = dma.vmem_to_hbm [thread:$0]  %s534, 32, %s3, [#allocation3], 32, 32, 2
    $region17: #{tpu_custom_call.1} parent=1 // pred_fallthru
      _
    // Predicated region
    $region18: #{tpu_custom_call.1} parent=1 // pred_check
      _
    $region19: #{tpu_custom_call.1} parent=1 // pred_check_branch
      %541 = sbr.rel (0) target = $region21
    $region20: #{tpu_custom_call.1} parent=1 // pred_region
      %542 = dma.done [#allocation3], 128
    $region21: #{tpu_custom_call.1} parent=1 // pred_fallthru
      _
    %543 = vsyncpa [#allocation3], 1

</llo_original>
